<compile_context>
chip_gen: v5e
topology: v5e:2x2
jax: 0.10.0
libtpu: 0.0.40
codegen_flags: <defaults>
</compile_context>

<pallas_src>
import functools

import numpy as np

import jax
import jax.numpy as jnp
from jax.experimental import pallas as pl
from jax.experimental.pallas import tpu as pltpu


def _round_up(x: int, m: int) -> int:
    return ((x + m - 1) // m) * m


# ----------------------------------------------------------------------------
# Pallas kernel: one full NNConv layer, bucketed edge blocks, edge-major layout
#
#   blk_off / blk_cnt : (n_tiles,) int32   SMEM (scalar prefetch) — per dst
#                       tile: first edge-block index and number of edge blocks
#   hsrc_t  : (in_f, E_pad)        gathered source features, edges on lanes
#   ef_t    : (edge_fp, E_pad)     edge features (K padded to 8), edges on lanes
#   dst_row : (1, E_pad) int32     destination node id per edge (-1 = padding)
#   invdeg  : (1, n_dst_pad)       1 / in-degree (0 for isolated dst nodes)
#   wlin_t  : (in_f*out_f, edge_fp) edge-network Linear weight (transposed)
#   blin_c  : (in_f*out_f, 1)      edge-network Linear bias (column)
#   bias_c  : (out_f, 1)           NNConv output bias (column)
#   out_t   : (out_f, n_dst_pad)
#
# grid = (n_dst_tiles ["parallel"],  max_blocks_per_tile ["arbitrary"])
# ----------------------------------------------------------------------------
def nnconv_kernel(blk_off_ref, blk_cnt_ref, hsrc_ref, ef_ref, dst_ref,
                  invdeg_ref, wlin_ref, blin_ref, bias_ref, out_ref, acc_ref,
                  *, in_f, out_f, apply_elu):
    j = pl.program_id(0)                 # destination tile      ("parallel")
    k = pl.program_id(1)                 # edge block within it  ("arbitrary")
    tile_dst = acc_ref.shape[1]

    @pl.when(k == 0)
    def _init():
        acc_ref[...] = jnp.zeros_like(acc_ref)

    # Only real edge blocks of this dst tile; clamped repeat blocks are skipped.
    @pl.when(k < blk_cnt_ref[j])
    def _compute():
        # Edge network:  W_e^T = ReLU(W^T @ e^T + b)  -> (in_f*out_f, tile_e)
        w_flat = jnp.dot(wlin_ref[...], ef_ref[...],
                         preferred_element_type=jnp.float32) + blin_ref[...]
        w_flat = jnp.maximum(w_flat, 0.0)

        # Per-edge messages, edge-major (full 128-lane VPU FMAs):
        #   m_t[o, e] = sum_i hsrc_t[i, e] * w_flat[i*out_f + o, e]
        hsrc = hsrc_ref[...]
        tile_e = hsrc.shape[1]
        m_t = jnp.zeros((out_f, tile_e), jnp.float32)
        for i in range(in_f):            # small static in_f -> unrolled
            m_t = m_t + hsrc[i:i + 1, :] * w_flat[i * out_f:(i + 1) * out_f, :]

        # Scatter one-hot (tile_dst, tile_e): scalar-shift the lane-dense dst
        # row by this tile's base and compare against a sublane iota.  Padded
        # edges carry dst = -1 and never match (contribute zero).
        shifted = dst_ref[...] - j * tile_dst                  # (1, tile_e)
        d_sub = jax.lax.broadcasted_iota(jnp.int32, (tile_dst, tile_e), 0)
        onehot_t = jnp.where(shifted == d_sub, 1.0, 0.0)       # f32 directly

        # Sum over this edge block: f32 MXU, contracting the lane (edge) axis.
        acc_ref[...] += jax.lax.dot_general(
            m_t, onehot_t, (((1,), (1,)), ((), ())),
            preferred_element_type=jnp.float32)

    # Epilogue: mean (1/deg), bias, optional fused ELU, lane-dense store.
    @pl.when(k == pl.num_programs(1) - 1)
    def _finalize():
        res = acc_ref[...] * invdeg_ref[...] + bias_ref[...]
        if apply_elu:
            # TODO(synk): jnp.expm1 would be marginally more accurate near 0.
            res = jnp.where(res > 0.0, res,
                            jnp.exp(jnp.minimum(res, 0.0)) - 1.0)
        out_ref[...] = res.astype(out_ref.dtype)


def nnconv_pallas(blk_off, blk_cnt, hsrc_t, ef_t, dst_row, invdeg,
                  wlin_t, blin_c, bias_c, *, in_f, out_f, n_tiles, max_blocks,
                  tile_e, tile_dst, apply_elu):
    edge_fp, e_pad = ef_t.shape
    nd_pad = n_tiles * tile_dst

    kernel = functools.partial(nnconv_kernel, in_f=in_f, out_f=out_f,
                               apply_elu=apply_elu)

    def edge_map(j, k, off, cnt):
        # Steps past this dst tile's last edge block repeat that block: the
        # identical consecutive block index skips the DMA and the kernel skips
        # the compute via pl.when(k < cnt[j]).
        return 0, jnp.minimum(off[j] + k, off[j] + cnt[j] - 1)

    def dst_tile_map(j, k, off, cnt):
        return 0, j

    def const_map(j, k, off, cnt):
        return 0, 0

    # Work/traffic with bucketing: every edge block is processed exactly once.
    flops = (2 * e_pad * edge_fp * in_f * out_f       # edge-MLP matmul
             + 2 * e_pad * in_f * out_f               # per-edge messages (VPU)
             + 2 * e_pad * tile_dst * out_f)          # per-tile scatter matmul
    transcendentals = out_f * nd_pad if apply_elu else 0
    bytes_accessed = 4 * (hsrc_t.size + ef_t.size + dst_row.size + invdeg.size
                          + wlin_t.size + blin_c.size + bias_c.size
                          + out_f * nd_pad)

    return pl.pallas_call(
        kernel,
        out_shape=jax.ShapeDtypeStruct((out_f, nd_pad), jnp.float32),
        grid_spec=pltpu.PrefetchScalarGridSpec(
            num_scalar_prefetch=2,
            grid=(n_tiles, max_blocks),
            in_specs=[
                pl.BlockSpec((in_f, tile_e), edge_map),      # hsrc_t
                pl.BlockSpec((edge_fp, tile_e), edge_map),   # ef_t
                pl.BlockSpec((1, tile_e), edge_map),         # dst_row (lane-dense)
                pl.BlockSpec((1, tile_dst), dst_tile_map),   # invdeg
                pl.BlockSpec(wlin_t.shape, const_map),       # wlin_t (resident)
                pl.BlockSpec(blin_c.shape, const_map),       # blin_c
                pl.BlockSpec(bias_c.shape, const_map),       # bias_c
            ],
            out_specs=pl.BlockSpec((out_f, tile_dst), dst_tile_map),
            scratch_shapes=[pltpu.VMEM((out_f, tile_dst), jnp.float32)],
        ),
        compiler_params=pltpu.CompilerParams(
            dimension_semantics=("parallel", "arbitrary"),
            vmem_limit_bytes=32 * 1024 * 1024,
        ),
        cost_estimate=pl.CostEstimate(flops=flops,
                                      transcendentals=transcendentals,
                                      bytes_accessed=bytes_accessed),
    )(blk_off, blk_cnt, hsrc_t, ef_t, dst_row, invdeg, wlin_t, blin_c, bias_c)


# ----------------------------------------------------------------------------
# Host-side graph preprocessing (structure only): bucket edges by dst tile.
# ----------------------------------------------------------------------------
def prepare_block_bucketed(src_idx, dst_idx, n_dst, tile_e, tile_dst):
    """Sort edges by destination tile and pack them into tile_e-sized blocks so
    each dst tile owns a contiguous run of >=1 edge blocks.  Padding slots get
    dst=-1 (never match the one-hot) and src/perm=0 (harmless gathers).  Also
    builds 1/in-degree for the 'mean' reducer (0 for isolated dst nodes)."""
    src = np.asarray(src_idx, dtype=np.int64)
    dst = np.asarray(dst_idx, dtype=np.int64)
    nd_pad = _round_up(max(int(n_dst), 1), tile_dst)
    n_tiles = nd_pad // tile_dst

    tile_of_edge = dst // tile_dst
    order = np.argsort(tile_of_edge, kind="stable")
    src_s, dst_s, tile_s = src[order], dst[order], tile_of_edge[order]

    counts = np.bincount(tile_s, minlength=n_tiles).astype(np.int64)
    blk_cnt = np.maximum(1, -(-counts // tile_e)).astype(np.int32)  # >=1 per tile
    blk_off = np.zeros(n_tiles, np.int32)
    blk_off[1:] = np.cumsum(blk_cnt[:-1]).astype(np.int32)
    total_blocks = int(blk_cnt.sum())
    max_blocks = int(blk_cnt.max())
    e_pad = total_blocks * tile_e

    perm = np.zeros(e_pad, np.int64)           # edge gather index (pad -> 0)
    src_out = np.zeros(e_pad, np.int64)        # src node id       (pad -> 0)
    dst_out = np.full(e_pad, -1, np.int64)     # dst node id       (pad -> -1)
    edge_start = np.zeros(n_tiles, np.int64)
    edge_start[1:] = np.cumsum(counts[:-1])
    for t in range(n_tiles):
        c = int(counts[t])
        if c == 0:
            continue
        s0, d0 = int(edge_start[t]), int(blk_off[t]) * tile_e
        perm[d0:d0 + c] = order[s0:s0 + c]
        src_out[d0:d0 + c] = src_s[s0:s0 + c]
        dst_out[d0:d0 + c] = dst_s[s0:s0 + c]

    deg = np.bincount(dst, minlength=nd_pad).astype(np.float32)
    inv_deg = np.where(deg > 0, 1.0 / np.maximum(deg, 1.0), 0.0).astype(np.float32)

    return dict(
        perm=jnp.asarray(perm, jnp.int32),
        src_ids=jnp.asarray(src_out, jnp.int32),
        dst_row=jnp.asarray(dst_out.reshape(1, e_pad), jnp.int32),
        inv_deg=jnp.asarray(inv_deg.reshape(1, nd_pad)),
        blk_off=jnp.asarray(blk_off, jnp.int32),
        blk_cnt=jnp.asarray(blk_cnt, jnp.int32),
        n_tiles=n_tiles, max_blocks=max_blocks, e_pad=e_pad, nd_pad=nd_pad)


# ----------------------------------------------------------------------------
# Parameters + forward
# ----------------------------------------------------------------------------
def init_nmp_params(key, in_feats, h_feats, edge_feats):
    ks = jax.random.split(key, 4)

    def lin_t(k, fan_in, fan_out):
        bound = float(1.0 / (fan_in ** 0.5))
        kw, kb = jax.random.split(k)
        w_t = jax.random.uniform(kw, (fan_out, fan_in), jnp.float32, -bound, bound)
        b_c = jax.random.uniform(kb, (fan_out, 1), jnp.float32, -bound, bound)
        return w_t, b_c

    w1_t, b1_c = lin_t(ks[0], edge_feats, in_feats * h_feats)   # edge_func1
    w2_t, b2_c = lin_t(ks[1], edge_feats, h_feats * h_feats)    # edge_func2
    bias1_c = jax.random.uniform(ks[2], (h_feats, 1), jnp.float32, -0.1, 0.1)
    bias2_c = jax.random.uniform(ks[3], (h_feats, 1), jnp.float32, -0.1, 0.1)
    return dict(w1_t=w1_t, b1_c=b1_c, bias1_c=bias1_c,
                w2_t=w2_t, b2_c=b2_c, bias2_c=bias2_c)


def nmp_forward(params, blocks, in_feat, edge_feats0, edge_feats1,
                in_feats, h_feats, edge_feats, *, tile_e=512, tile_dst=256):
    (src0, dst0, n_dst0), (src1, dst1, n_dst1) = blocks
    edge_fp = _round_up(edge_feats, 8)            # pad edge-MLP K to a sublane multiple
    kpad = ((0, 0), (0, edge_fp - edge_feats))
    w1p = jnp.pad(params["w1_t"], kpad)
    w2p = jnp.pad(params["w2_t"], kpad)

    # ---- conv1 + fused ELU -------------------------------------------------
    g0 = prepare_block_bucketed(src0, dst0, n_dst0, tile_e, tile_dst)
    # Data-dependent source gather stays as XLA glue; the (needed anyway)
    # bucketing gather also folds in the edge-major transpose -> one HBM pass.
    hsrc0_t = jnp.take(in_feat.T, g0["src_ids"], axis=1)               # (in_f, e_pad)
    ef0_t = jnp.take(jnp.pad(edge_feats0, kpad).T, g0["perm"], axis=1)  # (edge_fp, e_pad)
    h_t = nnconv_pallas(g0["blk_off"], g0["blk_cnt"], hsrc0_t, ef0_t,
                        g0["dst_row"], g0["inv_deg"],
                        w1p, params["b1_c"], params["bias1_c"],
                        in_f=in_feats, out_f=h_feats,
                        n_tiles=g0["n_tiles"], max_blocks=g0["max_blocks"],
                        tile_e=tile_e, tile_dst=tile_dst, apply_elu=True)

    # ---- conv2 -------------------------------------------------------------
    g1 = prepare_block_bucketed(src1, dst1, n_dst1, tile_e, tile_dst)
    # TODO(synk): fuse this inter-layer source gather in-kernel (scalar-prefetched
    # src ids + in-VMEM gather of the small h_t) to avoid the HBM round trip.
    hsrc1_t = jnp.take(h_t, g1["src_ids"], axis=1)                     # (h_feats, e_pad)
    ef1_t = jnp.take(jnp.pad(edge_feats1, kpad).T, g1["perm"], axis=1)
    out_t = nnconv_pallas(g1["blk_off"], g1["blk_cnt"], hsrc1_t, ef1_t,
                          g1["dst_row"], g1["inv_deg"],
                          w2p, params["b2_c"], params["bias2_c"],
                          in_f=h_feats, out_f=h_feats,
                          n_tiles=g1["n_tiles"], max_blocks=g1["max_blocks"],
                          tile_e=tile_e, tile_dst=tile_dst, apply_elu=False)
    return out_t[:, :n_dst1].T                                         # (n_dst1, h_feats)


# ----------------------------------------------------------------------------
# Pure-JAX reference (dense) for validation
# ----------------------------------------------------------------------------
def nmp_reference(params, blocks, in_feat, ef0, ef1, in_feats, h_feats):
    (src0, dst0, n_dst0), (src1, dst1, n_dst1) = blocks

    def nnconv(feat_src, src, dst, n_dst, ef, w_t, b_c, bias_c, in_f, out_f):
        w = jnp.maximum(ef @ w_t.T + b_c[:, 0], 0.0).reshape(-1, in_f, out_f)
        m = jnp.einsum('ei,eio->eo', feat_src[src], w)
        agg = jnp.zeros((n_dst, out_f), jnp.float32).at[dst].add(m)
        deg = jnp.zeros((n_dst,), jnp.float32).at[dst].add(1.0)
        mean = jnp.where(deg[:, None] > 0,
                         agg / jnp.maximum(deg[:, None], 1.0), 0.0)
        return mean + bias_c[:, 0]

    h = nnconv(in_feat, src0, dst0, n_dst0, ef0, params["w1_t"], params["b1_c"],
               params["bias1_c"], in_feats, h_feats)
    h = jnp.where(h > 0.0, h, jnp.exp(jnp.minimum(h, 0.0)) - 1.0)
    return nnconv(h, src1, dst1, n_dst1, ef1, params["w2_t"], params["b2_c"],
                  params["bias2_c"], h_feats, h_feats)


# ----------------------------------------------------------------------------
if __name__ == "__main__":
    in_feats, h_feats, edge_feats = 4, 8, 6

    # synthetic bipartite "blocks" (DGL-style): (src_idx, dst_idx, n_dst)
    n_src0, n_dst0, e0 = 10, 6, 16
    n_src1, n_dst1, e1 = 6, 4, 12   # block1 src nodes == block0 dst nodes

    key = jax.random.PRNGKey(0)
    k_feat, k_e0, k_e1, k_g0s, k_g0d, k_g1s, k_g1d, k_par = jax.random.split(key, 8)

    in_feat = jax.random.normal(k_feat, (n_src0, in_feats), jnp.float32)
    ef0 = jax.random.normal(k_e0, (e0, edge_feats), jnp.float32)
    ef1 = jax.random.normal(k_e1, (e1, edge_feats), jnp.float32)

    src0 = jax.random.randint(k_g0s, (e0,), 0, n_src0)
    dst0 = jax.random.randint(k_g0d, (e0,), 0, n_dst0)
    src1 = jax.random.randint(k_g1s, (e1,), 0, n_src1)
    dst1 = jax.random.randint(k_g1d, (e1,), 0, n_dst1)
    blocks = ((src0, dst0, n_dst0), (src1, dst1, n_dst1))

    params = init_nmp_params(k_par, in_feats, h_feats, edge_feats)

    out = nmp_forward(params, blocks, in_feat, ef0, ef1,
                      in_feats, h_feats, edge_feats)
    out = jax.block_until_ready(out)
    assert out.shape == (n_dst1, h_feats)
    assert bool(jnp.all(jnp.isfinite(out)))

    ref = nmp_reference(params, blocks, in_feat, ef0, ef1, in_feats, h_feats)
    err = float(jnp.max(jnp.abs(out - ref)))
    assert err < 1e-1, f"max abs err vs reference: {err}"
    print("KERNEL_OK")
</pallas_src>

<mosaic_0001>
module attributes {stable_mosaic.version = 11 : i64} {
  func.func @nnconv_kernel(%arg0: i32, %arg1: i32, %arg2: memref<1xi32, #tpu.memory_space<smem>>, %arg3: memref<1xi32, #tpu.memory_space<smem>>, %arg4: memref<4x512xf32, #tpu.memory_space<vmem>>, %arg5: memref<8x512xf32, #tpu.memory_space<vmem>>, %arg6: memref<1x512xi32, #tpu.memory_space<vmem>>, %arg7: memref<1x256xf32, #tpu.memory_space<vmem>>, %arg8: memref<32x8xf32, #tpu.memory_space<vmem>>, %arg9: memref<32x1xf32, #tpu.memory_space<vmem>>, %arg10: memref<8x1xf32, #tpu.memory_space<vmem>>, %arg11: memref<8x256xf32, #tpu.memory_space<vmem>>, %arg12: memref<8x256xf32, #tpu.memory_space<vmem>>) attributes {dimension_semantics = [#tpu.dimension_semantics<parallel>, #tpu.dimension_semantics<arbitrary>], iteration_bounds = array<i64: 1, 1>, scalar_prefetch = 2 : i64, scratch_operands = 1 : i64, tpu.core_type = #tpu.core_type<tc>, window_params = [{transform_indices = @transform_0, window_bounds = array<i64: 4, 512>}, {transform_indices = @transform_1, window_bounds = array<i64: 8, 512>}, {transform_indices = @transform_2, window_bounds = array<i64: 1, 512>}, {transform_indices = @transform_3, window_bounds = array<i64: 1, 256>}, {pipeline_mode = #tpu.pipeline_mode<synchronous>, transform_indices = @transform_4, window_bounds = array<i64: 32, 8>}, {pipeline_mode = #tpu.pipeline_mode<synchronous>, transform_indices = @transform_5, window_bounds = array<i64: 32, 1>}, {pipeline_mode = #tpu.pipeline_mode<synchronous>, transform_indices = @transform_6, window_bounds = array<i64: 8, 1>}, {transform_indices = @transform_7, window_bounds = array<i64: 8, 256>}]} {
    %c0_i32 = arith.constant 0 : i32
    %0 = arith.cmpi eq, %arg1, %c0_i32 : i32
    %1 = arith.extui %0 : i1 to i32
    %c0_i32_0 = arith.constant 0 : i32
    %2 = arith.cmpi ne, %1, %c0_i32_0 : i32
    scf.if %2 {
      %cst = arith.constant 0.000000e+00 : f32
      %11 = vector.broadcast %cst : f32 to vector<8x256xf32>
      %c0 = arith.constant 0 : index
      %c0_4 = arith.constant 0 : index
      %12 = vector.load %arg12[%c0, %c0_4] : memref<8x256xf32, #tpu.memory_space<vmem>>, vector<8x256xf32>
      tpu.vector_store %arg12[%c0, %c0_4], %11 {strides = array<i32>} : memref<8x256xf32, #tpu.memory_space<vmem>>, vector<8x256xf32>,
    } else {
    }
    %3 = arith.index_cast %arg0 : i32 to index
    %4 = memref.load %arg3[%3] : memref<1xi32, #tpu.memory_space<smem>>
    %5 = arith.cmpi slt, %arg1, %4 : i32
    %6 = arith.extui %5 : i1 to i32
    %c0_i32_1 = arith.constant 0 : i32
    %7 = arith.cmpi ne, %6, %c0_i32_1 : i32
    scf.if %7 {
      %c0 = arith.constant 0 : index
      %c0_4 = arith.constant 0 : index
      %11 = vector.load %arg8[%c0, %c0_4] : memref<32x8xf32, #tpu.memory_space<vmem>>, vector<32x8xf32>
      %c0_5 = arith.constant 0 : index
      %c0_6 = arith.constant 0 : index
      %12 = vector.load %arg5[%c0_5, %c0_6] : memref<8x512xf32, #tpu.memory_space<vmem>>, vector<8x512xf32>
      %cst = arith.constant dense<0.000000e+00> : vector<32x512xf32>
      %13 = tpu.matmul %11, %12, %cst {dimension_numbers = #tpu.dot_dimension_numbers<[1], [0], [0], [1], [0, 0, 1, 1], [], []>} : vector<32x8xf32>, vector<8x512xf32>, vector<32x512xf32> -> vector<32x512xf32>
      %c0_7 = arith.constant 0 : index
      %c0_8 = arith.constant 0 : index
      %14 = vector.load %arg9[%c0_7, %c0_8] : memref<32x1xf32, #tpu.memory_space<vmem>>, vector<32x1xf32>
      %15 = vector.broadcast %14 : vector<32x1xf32> to vector<32x512xf32>
      %16 = arith.addf %13, %15 : vector<32x512xf32>
      %cst_9 = arith.constant 0.000000e+00 : f32
      %17 = vector.broadcast %cst_9 : f32 to vector<32x512xf32>
      %18 = arith.maximumf %16, %17 : vector<32x512xf32>
      %c0_10 = arith.constant 0 : index
      %c0_11 = arith.constant 0 : index
      %19 = vector.load %arg4[%c0_10, %c0_11] : memref<4x512xf32, #tpu.memory_space<vmem>>, vector<4x512xf32>
      %cst_12 = arith.constant 0.000000e+00 : f32
      %20 = vector.broadcast %cst_12 : f32 to vector<8x512xf32>
      %21 = vector.extract_strided_slice %19 {offsets = [0, 0], sizes = [1, 512], strides = [1, 1]} : vector<4x512xf32> to vector<1x512xf32>
      %22 = vector.extract_strided_slice %18 {offsets = [0, 0], sizes = [8, 512], strides = [1, 1]} : vector<32x512xf32> to vector<8x512xf32>
      %23 = vector.broadcast %21 : vector<1x512xf32> to vector<8x512xf32>
      %24 = arith.mulf %23, %22 : vector<8x512xf32>
      %25 = arith.addf %20, %24 : vector<8x512xf32>
      %26 = vector.extract_strided_slice %19 {offsets = [1, 0], sizes = [1, 512], strides = [1, 1]} : vector<4x512xf32> to vector<1x512xf32>
      %27 = vector.extract_strided_slice %18 {offsets = [8, 0], sizes = [8, 512], strides = [1, 1]} : vector<32x512xf32> to vector<8x512xf32>
      %28 = vector.broadcast %26 : vector<1x512xf32> to vector<8x512xf32>
      %29 = arith.mulf %28, %27 : vector<8x512xf32>
      %30 = arith.addf %25, %29 : vector<8x512xf32>
      %31 = vector.extract_strided_slice %19 {offsets = [2, 0], sizes = [1, 512], strides = [1, 1]} : vector<4x512xf32> to vector<1x512xf32>
      %32 = vector.extract_strided_slice %18 {offsets = [16, 0], sizes = [8, 512], strides = [1, 1]} : vector<32x512xf32> to vector<8x512xf32>
      %33 = vector.broadcast %31 : vector<1x512xf32> to vector<8x512xf32>
      %34 = arith.mulf %33, %32 : vector<8x512xf32>
      %35 = arith.addf %30, %34 : vector<8x512xf32>
      %36 = vector.extract_strided_slice %19 {offsets = [3, 0], sizes = [1, 512], strides = [1, 1]} : vector<4x512xf32> to vector<1x512xf32>
      %37 = vector.extract_strided_slice %18 {offsets = [24, 0], sizes = [8, 512], strides = [1, 1]} : vector<32x512xf32> to vector<8x512xf32>
      %38 = vector.broadcast %36 : vector<1x512xf32> to vector<8x512xf32>
      %39 = arith.mulf %38, %37 : vector<8x512xf32>
      %40 = arith.addf %35, %39 : vector<8x512xf32>
      %c0_13 = arith.constant 0 : index
      %c0_14 = arith.constant 0 : index
      %41 = vector.load %arg6[%c0_13, %c0_14] : memref<1x512xi32, #tpu.memory_space<vmem>>, vector<1x512xi32>
      %c256_i32 = arith.constant 256 : i32
      %42 = arith.muli %arg0, %c256_i32 : i32
      %43 = vector.broadcast %42 : i32 to vector<1x512xi32>
      %44 = arith.subi %41, %43 : vector<1x512xi32>
      %45 = tpu.iota {dimensions = array<i32: 0>} : vector<256x512xi32>
      %46 = vector.broadcast %44 : vector<1x512xi32> to vector<256x512xi32>
      %47 = arith.cmpi eq, %46, %45 : vector<256x512xi32>
      %cst_15 = arith.constant 1.000000e+00 : f32
      %cst_16 = arith.constant 0.000000e+00 : f32
      %48 = vector.broadcast %cst_15 : f32 to vector<256x512xf32>
      %49 = vector.broadcast %cst_16 : f32 to vector<256x512xf32>
      %50 = arith.select %47, %48, %49 : vector<256x512xi1>, vector<256x512xf32>
      %c0_17 = arith.constant 0 : index
      %c0_18 = arith.constant 0 : index
      %51 = vector.load %arg12[%c0_17, %c0_18] : memref<8x256xf32, #tpu.memory_space<vmem>>, vector<8x256xf32>
      %cst_19 = arith.constant dense<0.000000e+00> : vector<8x256xf32>
      %52 = tpu.matmul %40, %50, %cst_19 {dimension_numbers = #tpu.dot_dimension_numbers<[1], [1], [0], [0], [0, 0, 1, 0], [], []>} : vector<8x512xf32>, vector<256x512xf32>, vector<8x256xf32> -> vector<8x256xf32>
      %53 = arith.addf %51, %52 : vector<8x256xf32>
      %c0_20 = arith.constant 0 : index
      %c0_21 = arith.constant 0 : index
      %54 = vector.load %arg12[%c0_20, %c0_21] : memref<8x256xf32, #tpu.memory_space<vmem>>, vector<8x256xf32>
      tpu.vector_store %arg12[%c0_20, %c0_21], %53 {strides = array<i32>} : memref<8x256xf32, #tpu.memory_space<vmem>>, vector<8x256xf32>,
    } else {
    }
    %c0_i32_2 = arith.constant 0 : i32
    %8 = arith.cmpi eq, %arg1, %c0_i32_2 : i32
    %9 = arith.extui %8 : i1 to i32
    %c0_i32_3 = arith.constant 0 : i32
    %10 = arith.cmpi ne, %9, %c0_i32_3 : i32
    scf.if %10 {
      %c0 = arith.constant 0 : index
      %c0_4 = arith.constant 0 : index
      %11 = vector.load %arg12[%c0, %c0_4] : memref<8x256xf32, #tpu.memory_space<vmem>>, vector<8x256xf32>
      %c0_5 = arith.constant 0 : index
      %c0_6 = arith.constant 0 : index
      %12 = vector.load %arg7[%c0_5, %c0_6] : memref<1x256xf32, #tpu.memory_space<vmem>>, vector<1x256xf32>
      %13 = vector.broadcast %12 : vector<1x256xf32> to vector<8x256xf32>
      %14 = arith.mulf %11, %13 : vector<8x256xf32>
      %c0_7 = arith.constant 0 : index
      %c0_8 = arith.constant 0 : index
      %15 = vector.load %arg10[%c0_7, %c0_8] : memref<8x1xf32, #tpu.memory_space<vmem>>, vector<8x1xf32>
      %16 = vector.broadcast %15 : vector<8x1xf32> to vector<8x256xf32>
      %17 = arith.addf %14, %16 : vector<8x256xf32>
      %cst = arith.constant 0.000000e+00 : f32
      %18 = vector.broadcast %cst : f32 to vector<8x256xf32>
      %19 = arith.cmpf ogt, %17, %18 : vector<8x256xf32>
      %cst_9 = arith.constant 0.000000e+00 : f32
      %20 = vector.broadcast %cst_9 : f32 to vector<8x256xf32>
      %21 = arith.minimumf %17, %20 : vector<8x256xf32>
      %22 = math.exp %21 : vector<8x256xf32>
      %cst_10 = arith.constant 1.000000e+00 : f32
      %23 = vector.broadcast %cst_10 : f32 to vector<8x256xf32>
      %24 = arith.subf %22, %23 : vector<8x256xf32>
      %25 = arith.select %19, %17, %24 : vector<8x256xi1>, vector<8x256xf32>
      %c0_11 = arith.constant 0 : index
      %c0_12 = arith.constant 0 : index
      %26 = vector.load %arg11[%c0_11, %c0_12] : memref<8x256xf32, #tpu.memory_space<vmem>>, vector<8x256xf32>
      tpu.vector_store %arg11[%c0_11, %c0_12], %25 {strides = array<i32>} : memref<8x256xf32, #tpu.memory_space<vmem>>, vector<8x256xf32>,
    } else {
    }
    return
  }
  func.func @transform_0(%arg0: i32, %arg1: i32, %arg2: memref<1xi32, #tpu.memory_space<smem>>, %arg3: memref<1xi32, #tpu.memory_space<smem>>) -> (i32, i32) {
    %0 = arith.index_cast %arg0 : i32 to index
    %1 = memref.load %arg2[%0] : memref<1xi32, #tpu.memory_space<smem>>
    %2 = arith.addi %1, %arg1 : i32
    %3 = arith.index_cast %arg0 : i32 to index
    %4 = memref.load %arg2[%3] : memref<1xi32, #tpu.memory_space<smem>>
    %5 = arith.index_cast %arg0 : i32 to index
    %6 = memref.load %arg3[%5] : memref<1xi32, #tpu.memory_space<smem>>
    %7 = arith.addi %4, %6 : i32
    %c1_i32 = arith.constant 1 : i32
    %8 = arith.subi %7, %c1_i32 : i32
    %9 = arith.minsi %2, %8 : i32
    %c0_i32 = arith.constant 0 : i32
    %c0_i32_0 = arith.constant 0 : i32
    return %c0_i32, %9 : i32, i32
  }
  func.func @transform_1(%arg0: i32, %arg1: i32, %arg2: memref<1xi32, #tpu.memory_space<smem>>, %arg3: memref<1xi32, #tpu.memory_space<smem>>) -> (i32, i32) {
    %0 = arith.index_cast %arg0 : i32 to index
    %1 = memref.load %arg2[%0] : memref<1xi32, #tpu.memory_space<smem>>
    %2 = arith.addi %1, %arg1 : i32
    %3 = arith.index_cast %arg0 : i32 to index
    %4 = memref.load %arg2[%3] : memref<1xi32, #tpu.memory_space<smem>>
    %5 = arith.index_cast %arg0 : i32 to index
    %6 = memref.load %arg3[%5] : memref<1xi32, #tpu.memory_space<smem>>
    %7 = arith.addi %4, %6 : i32
    %c1_i32 = arith.constant 1 : i32
    %8 = arith.subi %7, %c1_i32 : i32
    %9 = arith.minsi %2, %8 : i32
    %c0_i32 = arith.constant 0 : i32
    %c0_i32_0 = arith.constant 0 : i32
    return %c0_i32, %9 : i32, i32
  }
  func.func @transform_2(%arg0: i32, %arg1: i32, %arg2: memref<1xi32, #tpu.memory_space<smem>>, %arg3: memref<1xi32, #tpu.memory_space<smem>>) -> (i32, i32) {
    %0 = arith.index_cast %arg0 : i32 to index
    %1 = memref.load %arg2[%0] : memref<1xi32, #tpu.memory_space<smem>>
    %2 = arith.addi %1, %arg1 : i32
    %3 = arith.index_cast %arg0 : i32 to index
    %4 = memref.load %arg2[%3] : memref<1xi32, #tpu.memory_space<smem>>
    %5 = arith.index_cast %arg0 : i32 to index
    %6 = memref.load %arg3[%5] : memref<1xi32, #tpu.memory_space<smem>>
    %7 = arith.addi %4, %6 : i32
    %c1_i32 = arith.constant 1 : i32
    %8 = arith.subi %7, %c1_i32 : i32
    %9 = arith.minsi %2, %8 : i32
    %c0_i32 = arith.constant 0 : i32
    %c0_i32_0 = arith.constant 0 : i32
    return %c0_i32, %9 : i32, i32
  }
  func.func @transform_3(%arg0: i32, %arg1: i32, %arg2: memref<1xi32, #tpu.memory_space<smem>>, %arg3: memref<1xi32, #tpu.memory_space<smem>>) -> (i32, i32) {
    %c0_i32 = arith.constant 0 : i32
    %c0_i32_0 = arith.constant 0 : i32
    return %c0_i32, %arg0 : i32, i32
  }
  func.func @transform_4(%arg0: i32, %arg1: i32, %arg2: memref<1xi32, #tpu.memory_space<smem>>, %arg3: memref<1xi32, #tpu.memory_space<smem>>) -> (i32, i32) {
    %c0_i32 = arith.constant 0 : i32
    %c0_i32_0 = arith.constant 0 : i32
    %c0_i32_1 = arith.constant 0 : i32
    return %c0_i32, %c0_i32_0 : i32, i32
  }
  func.func @transform_5(%arg0: i32, %arg1: i32, %arg2: memref<1xi32, #tpu.memory_space<smem>>, %arg3: memref<1xi32, #tpu.memory_space<smem>>) -> (i32, i32) {
    %c0_i32 = arith.constant 0 : i32
    %c0_i32_0 = arith.constant 0 : i32
    %c0_i32_1 = arith.constant 0 : i32
    return %c0_i32, %c0_i32_0 : i32, i32
  }
  func.func @transform_6(%arg0: i32, %arg1: i32, %arg2: memref<1xi32, #tpu.memory_space<smem>>, %arg3: memref<1xi32, #tpu.memory_space<smem>>) -> (i32, i32) {
    %c0_i32 = arith.constant 0 : i32
    %c0_i32_0 = arith.constant 0 : i32
    %c0_i32_1 = arith.constant 0 : i32
    return %c0_i32, %c0_i32_0 : i32, i32
  }
  func.func @transform_7(%arg0: i32, %arg1: i32, %arg2: memref<1xi32, #tpu.memory_space<smem>>, %arg3: memref<1xi32, #tpu.memory_space<smem>>) -> (i32, i32) {
    %c0_i32 = arith.constant 0 : i32
    %c0_i32_0 = arith.constant 0 : i32
    return %c0_i32, %arg0 : i32, i32
  }
}

</mosaic_0001>

<llo_original>
// kernel: tpu_custom_call.1
$region0: #{tpu_custom_call.1}
  #allocation0 [shape = 'u32[]', space=smem, size = 0x4, offset = 0x4, fixed_abs, tag = 'smem constant byte address 0x4 - core index']
  #allocation1 [shape = 'u32[72,128]{1,0:T(1,128)}', space=vmem, size = 0x9000, scoped, tag = 'internal scratch']
  #allocation2 [shape = 'f32[8,256]{1,0:T(8,128)}', space=vmem, size = 0x2000, scoped, tag = 'scratch operand']
  #allocation3 [shape = 's32[1]{0}', space=sflag, size = 0x4, scoped, tag = 'scoped memory for tpu_custom_call.1']
  #allocation4 [shape = 's32[1]{0:T(128)S(6)}', space=smem, size = 0x200, scoped, tag = 'prefetched SMEM operand 0']
  #allocation5 [shape = 's32[1]{0:T(128)S(6)}', space=smem, size = 0x200, scoped, tag = 'prefetched SMEM operand 1']
  %s0 = inlined_call_operand.<no memory space> [shape: s32[1], index: 0, kind: input, shape index: {}]
  %s1 = inlined_call_operand.<no memory space> [shape: s32[1], index: 1, kind: input, shape index: {}]
  %s2 = inlined_call_operand.vmem [shape: f32[4,512], index: 2, kind: input, shape index: {}]
  %s3 = inlined_call_operand.vmem [shape: f32[8,512], index: 3, kind: input, shape index: {}]
  %s4 = inlined_call_operand.vmem [shape: s32[1,512], index: 4, kind: input, shape index: {}]
  %s5 = inlined_call_operand.vmem [shape: f32[1,256], index: 5, kind: input, shape index: {}]
  %s6 = inlined_call_operand.vmem [shape: f32[32,8], index: 6, kind: input, shape index: {}]
  %s7 = inlined_call_operand.vmem [shape: f32[32,1], index: 7, kind: input, shape index: {}]
  %s8 = inlined_call_operand.vmem [shape: f32[8,1], index: 8, kind: input, shape index: {}]
  %s9 = inlined_call_operand.hbm [shape: f32[8,256], index: 9, kind: output, shape index: {}]
  %s10 = sld [smem:[#allocation0]]
  $region50: #{tpu_custom_call.1} parent=0
    _
  %s12 = ssub.s32 1, %s10
  %s13 = scalar_select 0, %s12, %s10
  %14 = sst [smem:[#allocation4]] %s0
  %15 = sst [smem:[#allocation5]] %s1
  $region1: #{tpu_custom_call.1} parent=0
    #allocation6 [shape = 'u8[8192]{0}', space=vmem, size = 0x2000, scoped, tag = 'output window, operand 0, single buffered']
    #allocation7 [shape = 's32[1]{0}', space=sflag, size = 0x4, scoped, tag = 'scoped memory for tpu_custom_call.1']
    %16 = vsyncpa [#allocation7], 0
    // Predicated region
    $region2: #{tpu_custom_call.1} parent=1 // pred_check
      _
    $region3: #{tpu_custom_call.1} parent=1 // pred_check_branch
      %18 = sbr.rel (0) target = $region5
    $region4: #{tpu_custom_call.1} parent=1 // pred_region
      %s19 = sld [smem:[#allocation4]]
      %s20 = sadd.s32 %s19, 0
      %s21 = sld [smem:[#allocation5]]
      %s22 = sadd.s32 %s19, %s21
      %s23 = ssub.s32 %s22, 1
      %p24 = scmp.lt.s32.totalorder %s20, %s23
      %s25 = scalar_select %p24, %s20, %s23
      %s26 = smul.u32 4, %s25
      %p27 = scmp.lt.s32.totalorder %s26, 3
      %s28 = scalar_select %p27, %s26, 3
      %s29 = smul.addr %s28, 4
      %s30 = scalar_lea.vmem %s2, %s29
      %s31 = sld [smem:[#allocation4]]
      %s32 = sadd.s32 %s31, 0
      %s33 = sld [smem:[#allocation5]]
      %s34 = sadd.s32 %s31, %s33
      %s35 = ssub.s32 %s34, 1
      %p36 = scmp.lt.s32.totalorder %s32, %s35
      %s37 = scalar_select %p36, %s32, %s35
      %s38 = smul.u32 4, %s37
    $region5: #{tpu_custom_call.1} parent=1 // pred_fallthru
      _
    // Predicated region
    $region6: #{tpu_custom_call.1} parent=1 // pred_check
      _
    $region7: #{tpu_custom_call.1} parent=1 // pred_check_branch
      %40 = sbr.rel (0) target = $region9
    $region8: #{tpu_custom_call.1} parent=1 // pred_region
      %s41 = sld [smem:[#allocation4]]
      %s42 = sadd.s32 %s41, 0
      %s43 = sld [smem:[#allocation5]]
      %s44 = sadd.s32 %s41, %s43
      %s45 = ssub.s32 %s44, 1
      %p46 = scmp.lt.s32.totalorder %s42, %s45
      %s47 = scalar_select %p46, %s42, %s45
      %s48 = smul.u32 4, %s47
      %p49 = scmp.lt.s32.totalorder %s48, 3
      %s50 = scalar_select %p49, %s48, 3
      %s51 = smul.addr %s50, 8
      %s52 = scalar_lea.vmem %s3, %s51
      %s53 = sld [smem:[#allocation4]]
      %s54 = sadd.s32 %s53, 0
      %s55 = sld [smem:[#allocation5]]
      %s56 = sadd.s32 %s53, %s55
      %s57 = ssub.s32 %s56, 1
      %p58 = scmp.lt.s32.totalorder %s54, %s57
      %s59 = scalar_select %p58, %s54, %s57
      %s60 = smul.u32 4, %s59
    $region9: #{tpu_custom_call.1} parent=1 // pred_fallthru
      _
    // Predicated region
    $region10: #{tpu_custom_call.1} parent=1 // pred_check
      _
    $region11: #{tpu_custom_call.1} parent=1 // pred_check_branch
      %62 = sbr.rel (0) target = $region13
    $region12: #{tpu_custom_call.1} parent=1 // pred_region
      %s63 = sld [smem:[#allocation4]]
      %s64 = sadd.s32 %s63, 0
      %s65 = sld [smem:[#allocation5]]
      %s66 = sadd.s32 %s63, %s65
      %s67 = ssub.s32 %s66, 1
      %p68 = scmp.lt.s32.totalorder %s64, %s67
      %s69 = scalar_select %p68, %s64, %s67
      %s70 = smul.u32 4, %s69
      %p71 = scmp.lt.s32.totalorder %s70, 3
      %s72 = scalar_select %p71, %s70, 3
      %s73 = scalar_lea.vmem %s4, %s72
      %s74 = sld [smem:[#allocation4]]
      %s75 = sadd.s32 %s74, 0
      %s76 = sld [smem:[#allocation5]]
      %s77 = sadd.s32 %s74, %s76
      %s78 = ssub.s32 %s77, 1
      %p79 = scmp.lt.s32.totalorder %s75, %s78
      %s80 = scalar_select %p79, %s75, %s78
      %s81 = smul.u32 4, %s80
    $region13: #{tpu_custom_call.1} parent=1 // pred_fallthru
      _
    // Predicated region
    $region14: #{tpu_custom_call.1} parent=1 // pred_check
      _
    $region15: #{tpu_custom_call.1} parent=1 // pred_check_branch
      %83 = sbr.rel (0) target = $region17
    $region16: #{tpu_custom_call.1} parent=1 // pred_region
      _
    $region17: #{tpu_custom_call.1} parent=1 // pred_fallthru
      _
    // Predicated region
    $region18: #{tpu_custom_call.1} parent=1 // pred_check
      _
    $region19: #{tpu_custom_call.1} parent=1 // pred_check_branch
      %85 = sbr.rel (0) target = $region21
    $region20: #{tpu_custom_call.1} parent=1 // pred_region
      _
    $region21: #{tpu_custom_call.1} parent=1 // pred_fallthru
      _
    // Predicated region
    $region22: #{tpu_custom_call.1} parent=1 // pred_check
      _
    $region23: #{tpu_custom_call.1} parent=1 // pred_check_branch
      %87 = sbr.rel (0) target = $region25
    $region24: #{tpu_custom_call.1} parent=1 // pred_region
      _
    $region25: #{tpu_custom_call.1} parent=1 // pred_fallthru
      _
    // Predicated region
    $region26: #{tpu_custom_call.1} parent=1 // pred_check
      _
    $region27: #{tpu_custom_call.1} parent=1 // pred_check_branch
      %89 = sbr.rel (0) target = $region29
    $region28: #{tpu_custom_call.1} parent=1 // pred_region
      _
    $region29: #{tpu_custom_call.1} parent=1 // pred_fallthru
      _
    %s90 = sld [smem:[#allocation4]]
    %s91 = sadd.s32 %s90, 0
    %s92 = sld [smem:[#allocation5]]
    %s93 = sadd.s32 %s90, %s92
    %s94 = ssub.s32 %s93, 1
    %p95 = scmp.lt.s32.totalorder %s91, %s94
    %s96 = scalar_select %p95, %s91, %s94
    %s97 = smul.u32 4, %s96
    %p98 = scmp.lt.s32.totalorder %s97, 3
    %s99 = scalar_select %p98, %s97, 3
    %s100 = smul.addr %s99, 4
    %s101 = scalar_lea.vmem %s2, %s100
    %s102 = sld [smem:[#allocation4]]
    %s103 = sadd.s32 %s102, 0
    %s104 = sld [smem:[#allocation5]]
    %s105 = sadd.s32 %s102, %s104
    %s106 = ssub.s32 %s105, 1
    %p107 = scmp.lt.s32.totalorder %s103, %s106
    %s108 = scalar_select %p107, %s103, %s106
    %s109 = smul.u32 4, %s108
    %p110 = scmp.lt.s32.totalorder %s109, 3
    %s111 = scalar_select %p110, %s109, 3
    %s112 = smul.addr %s111, 8
    %s113 = scalar_lea.vmem %s3, %s112
    %s114 = sld [smem:[#allocation4]]
    %s115 = sadd.s32 %s114, 0
    %s116 = sld [smem:[#allocation5]]
    %s117 = sadd.s32 %s114, %s116
    %s118 = ssub.s32 %s117, 1
    %p119 = scmp.lt.s32.totalorder %s115, %s118
    %s120 = scalar_select %p119, %s115, %s118
    %s121 = smul.u32 4, %s120
    %p122 = scmp.lt.s32.totalorder %s121, 3
    %s123 = scalar_select %p122, %s121, 3
    %s124 = scalar_lea.vmem %s4, %s123
    %s125 = sld [smem:[#allocation4]]
    %s126 = sadd.s32 %s125, 0
    %s127 = sld [smem:[#allocation5]]
    %s128 = sadd.s32 %s125, %s127
    %s129 = ssub.s32 %s128, 1
    %p130 = scmp.lt.s32.totalorder %s126, %s129
    %s131 = scalar_select %p130, %s126, %s129
    %s132 = smul.u32 4, %s131
    %p133 = scmp.lt.s32.totalorder %s132, 3
    %s134 = scalar_select %p133, %s132, 3
    %s135 = smul.addr %s134, 4
    %s136 = scalar_lea.vmem %s2, %s135
    %s137 = sld [smem:[#allocation4]]
    %s138 = sadd.s32 %s137, 0
    %s139 = sld [smem:[#allocation5]]
    %s140 = sadd.s32 %s137, %s139
    %s141 = ssub.s32 %s140, 1
    %p142 = scmp.lt.s32.totalorder %s138, %s141
    %s143 = scalar_select %p142, %s138, %s141
    %s144 = smul.u32 4, %s143
    %s145 = sld [smem:[#allocation4]]
    %s146 = sadd.s32 %s145, 0
    %s147 = sld [smem:[#allocation5]]
    %s148 = sadd.s32 %s145, %s147
    %s149 = ssub.s32 %s148, 1
    %p150 = scmp.lt.s32.totalorder %s146, %s149
    %s151 = scalar_select %p150, %s146, %s149
    %s152 = smul.u32 4, %s151
    %p153 = scmp.lt.s32.totalorder %s152, 3
    %s154 = scalar_select %p153, %s152, 3
    %s155 = smul.addr %s154, 8
    %s156 = scalar_lea.vmem %s3, %s155
    %s157 = sld [smem:[#allocation4]]
    %s158 = sadd.s32 %s157, 0
    %s159 = sld [smem:[#allocation5]]
    %s160 = sadd.s32 %s157, %s159
    %s161 = ssub.s32 %s160, 1
    %p162 = scmp.lt.s32.totalorder %s158, %s161
    %s163 = scalar_select %p162, %s158, %s161
    %s164 = smul.u32 4, %s163
    %s165 = sld [smem:[#allocation4]]
    %s166 = sadd.s32 %s165, 0
    %s167 = sld [smem:[#allocation5]]
    %s168 = sadd.s32 %s165, %s167
    %s169 = ssub.s32 %s168, 1
    %p170 = scmp.lt.s32.totalorder %s166, %s169
    %s171 = scalar_select %p170, %s166, %s169
    %s172 = smul.u32 4, %s171
    %p173 = scmp.lt.s32.totalorder %s172, 3
    %s174 = scalar_select %p173, %s172, 3
    %s175 = scalar_lea.vmem %s4, %s174
    %s176 = sld [smem:[#allocation4]]
    %s177 = sadd.s32 %s176, 0
    %s178 = sld [smem:[#allocation5]]
    %s179 = sadd.s32 %s176, %s178
    %s180 = ssub.s32 %s179, 1
    %p181 = scmp.lt.s32.totalorder %s177, %s180
    %s182 = scalar_select %p181, %s177, %s180
    %s183 = smul.u32 4, %s182
    %p184 = scmp.eq.s32.totalorder 0, 0
    // Predicated region
    $region30: #{tpu_custom_call.1} parent=1 // pred_check
      %p185 = pneg %p184
    $region31: #{tpu_custom_call.1} parent=1 // pred_check_branch
      %187 = sbr.rel (%p185) target = $region33
    $region32: #{tpu_custom_call.1} parent=1 // pred_region
      %188 = vst [vmem:[#allocation2] sm:$0xff] 0.0
      %189 = vst [vmem:[#allocation2 + $0x8] sm:$0xff] 0.0
    $region33: #{tpu_custom_call.1} parent=1 // pred_fallthru
      _
    %s190 = sld [smem:[#allocation5]]
    %p191 = scmp.lt.s32.totalorder 0, %s190
    // Predicated region
    $region34: #{tpu_custom_call.1} parent=1 // pred_check
      %p192 = pneg %p191
    $region35: #{tpu_custom_call.1} parent=1 // pred_check_branch
      %194 = sbr.rel (%p192) target = $region37
    $region36: #{tpu_custom_call.1} parent=1 // pred_region
      %v195 = vld [vmem:[%s6] sm:$0xff]
      %v196 = vld [vmem:[%s6 + $0x8] sm:$0xff]
      %v197 = vld [vmem:[%s6 + $0x10] sm:$0xff]
      %v198 = vld [vmem:[%s6 + $0x18] sm:$0xff]
      %v199 = vld [vmem:[%s156] sm:$0xff]
      %v200 = vld [vmem:[%s156 + $0x8] sm:$0xff]
      %v201 = vld [vmem:[%s156 + $0x10] sm:$0xff]
      %v202 = vld [vmem:[%s156 + $0x18] sm:$0xff]
      %v203 = vld [vmem:[%s7] sm:$0xff]
      %v204 = vld [vmem:[%s7 + $0x8] sm:$0xff]
      %v205 = vld [vmem:[%s7 + $0x10] sm:$0xff]
      %v206 = vld [vmem:[%s7 + $0x18] sm:$0xff]
      %208 = vset.pattern.permute.xlu0 0
      %209 = vperm.xlu0 %208, %v203
      %v210 = vpop.permute.xlu0 %209
      %213 = vset.pattern.permute.xlu0 0
      %214 = vperm.xlu0 %213, %v204
      %v215 = vpop.permute.xlu0 %214
      %218 = vset.pattern.permute.xlu0 0
      %219 = vperm.xlu0 %218, %v205
      %v220 = vpop.permute.xlu0 %219
      %223 = vset.pattern.permute.xlu0 0
      %224 = vperm.xlu0 %223, %v206
      %v225 = vpop.permute.xlu0 %224
      %vm227 = vcmask 64512
      %v229 = vsel %vm227, %v195, 0
      %v232 = vsel %vm227, %v196, 0
      %v235 = vsel %vm227, %v197, 0
      %v238 = vsel %vm227, %v198, 0
      %240 = vmatpush.msra.mxu0 0.0
      %241 = vmatpush.msra.mxu0 0.0
      %242 = vmatpush.msra.mxu0 0.0
      %243 = vmatpush.msra.mxu0 0.0
      %244 = vmatpush.msra.mxu0 0.0
      %245 = vmatpush.msra.mxu0 0.0
      %246 = vmatpush.msra.mxu0 0.0
      %247 = vmatpush.msra.mxu0 0.0
      %248 = vmatpush.msra.mxu0 0.0
      %249 = vmatpush.msra.mxu0 0.0
      %250 = vmatpush.msra.mxu0 0.0
      %251 = vmatpush.msra.mxu0 0.0
      %252 = vmatpush.msra.mxu0 0.0
      %253 = vmatpush.msra.mxu0 0.0
      %254 = vmatpush.msra.mxu0 0.0
      %255 = vmatpush.msra.mxu0 %v199
      %256 = vmatmul.f32.gmra.mxu0 %v229
      %v257 = vpop.f32.mrf.mxu0
      %v258 = vadd.f32 %v210, %v257
      %259 = vmatmul.f32.gmra.mxu0 %v232
      %v260 = vpop.f32.mrf.mxu0
      %v261 = vadd.f32 %v215, %v260
      %262 = vmatmul.f32.gmra.mxu0 %v235
      %v263 = vpop.f32.mrf.mxu0
      %v264 = vadd.f32 %v220, %v263
      %265 = vmatmul.f32.gmra.mxu0 %v238
      %v266 = vpop.f32.mrf.mxu0
      %v267 = vadd.f32 %v225, %v266
      %268 = vdwg.mxu0
      %269 = vmatpush.msra.mxu0 0.0
      %270 = vmatpush.msra.mxu0 0.0
      %271 = vmatpush.msra.mxu0 0.0
      %272 = vmatpush.msra.mxu0 0.0
      %273 = vmatpush.msra.mxu0 0.0
      %274 = vmatpush.msra.mxu0 0.0
      %275 = vmatpush.msra.mxu0 0.0
      %276 = vmatpush.msra.mxu0 0.0
      %277 = vmatpush.msra.mxu0 0.0
      %278 = vmatpush.msra.mxu0 0.0
      %279 = vmatpush.msra.mxu0 0.0
      %280 = vmatpush.msra.mxu0 0.0
      %281 = vmatpush.msra.mxu0 0.0
      %282 = vmatpush.msra.mxu0 0.0
      %283 = vmatpush.msra.mxu0 0.0
      %284 = vmatpush.msra.mxu0 %v200
      %285 = vmatmul.f32.gmra.mxu0 %v229
      %v286 = vpop.f32.mrf.mxu0
      %v287 = vadd.f32 %v210, %v286
      %288 = vmatmul.f32.gmra.mxu0 %v232
      %v289 = vpop.f32.mrf.mxu0
      %v290 = vadd.f32 %v215, %v289
      %291 = vmatmul.f32.gmra.mxu0 %v235
      %v292 = vpop.f32.mrf.mxu0
      %v293 = vadd.f32 %v220, %v292
      %294 = vmatmul.f32.gmra.mxu0 %v238
      %v295 = vpop.f32.mrf.mxu0
      %v296 = vadd.f32 %v225, %v295
      %297 = vdwg.mxu0
      %298 = vmatpush.msra.mxu0 0.0
      %299 = vmatpush.msra.mxu0 0.0
      %300 = vmatpush.msra.mxu0 0.0
      %301 = vmatpush.msra.mxu0 0.0
      %302 = vmatpush.msra.mxu0 0.0
      %303 = vmatpush.msra.mxu0 0.0
      %304 = vmatpush.msra.mxu0 0.0
      %305 = vmatpush.msra.mxu0 0.0
      %306 = vmatpush.msra.mxu0 0.0
      %307 = vmatpush.msra.mxu0 0.0
      %308 = vmatpush.msra.mxu0 0.0
      %309 = vmatpush.msra.mxu0 0.0
      %310 = vmatpush.msra.mxu0 0.0
      %311 = vmatpush.msra.mxu0 0.0
      %312 = vmatpush.msra.mxu0 0.0
      %313 = vmatpush.msra.mxu0 %v201
      %314 = vmatmul.f32.gmra.mxu0 %v229
      %v315 = vpop.f32.mrf.mxu0
      %v316 = vadd.f32 %v210, %v315
      %317 = vmatmul.f32.gmra.mxu0 %v232
      %v318 = vpop.f32.mrf.mxu0
      %v319 = vadd.f32 %v215, %v318
      %320 = vmatmul.f32.gmra.mxu0 %v235
      %v321 = vpop.f32.mrf.mxu0
      %v322 = vadd.f32 %v220, %v321
      %323 = vmatmul.f32.gmra.mxu0 %v238
      %v324 = vpop.f32.mrf.mxu0
      %v325 = vadd.f32 %v225, %v324
      %326 = vdwg.mxu0
      %327 = vmatpush.msra.mxu0 0.0
      %328 = vmatpush.msra.mxu0 0.0
      %329 = vmatpush.msra.mxu0 0.0
      %330 = vmatpush.msra.mxu0 0.0
      %331 = vmatpush.msra.mxu0 0.0
      %332 = vmatpush.msra.mxu0 0.0
      %333 = vmatpush.msra.mxu0 0.0
      %334 = vmatpush.msra.mxu0 0.0
      %335 = vmatpush.msra.mxu0 0.0
      %336 = vmatpush.msra.mxu0 0.0
      %337 = vmatpush.msra.mxu0 0.0
      %338 = vmatpush.msra.mxu0 0.0
      %339 = vmatpush.msra.mxu0 0.0
      %340 = vmatpush.msra.mxu0 0.0
      %341 = vmatpush.msra.mxu0 0.0
      %342 = vmatpush.msra.mxu0 %v202
      %343 = vmatmul.f32.gmra.mxu0 %v229
      %v344 = vpop.f32.mrf.mxu0
      %v345 = vadd.f32 %v210, %v344
      %346 = vmatmul.f32.gmra.mxu0 %v232
      %v347 = vpop.f32.mrf.mxu0
      %v348 = vadd.f32 %v215, %v347
      %349 = vmatmul.f32.gmra.mxu0 %v235
      %v350 = vpop.f32.mrf.mxu0
      %v351 = vadd.f32 %v220, %v350
      %352 = vmatmul.f32.gmra.mxu0 %v238
      %v353 = vpop.f32.mrf.mxu0
      %v354 = vadd.f32 %v225, %v353
      %355 = vdwg.mxu0
      %v356 = vmax.f32 %v258, 0.0
      %v357 = vmax.f32 %v287, 0.0
      %v358 = vmax.f32 %v316, 0.0
      %v359 = vmax.f32 %v345, 0.0
      %v360 = vmax.f32 %v261, 0.0
      %v361 = vmax.f32 %v290, 0.0
      %v362 = vmax.f32 %v319, 0.0
      %v363 = vmax.f32 %v348, 0.0
      %v364 = vmax.f32 %v264, 0.0
      %v365 = vmax.f32 %v293, 0.0
      %v366 = vmax.f32 %v322, 0.0
      %v367 = vmax.f32 %v351, 0.0
      %v368 = vmax.f32 %v267, 0.0
      %v369 = vmax.f32 %v296, 0.0
      %v370 = vmax.f32 %v325, 0.0
      %v371 = vmax.f32 %v354, 0.0
      %v372 = vld [vmem:[%s136] sm:$0xff]
      %v373 = vld [vmem:[%s136 + $0x8] sm:$0xff]
      %v376 = vperm.slane %v372, 0
      %v377 = vperm.slane %v372, 4
      %v378 = vperm.slane %v373, 0
      %v379 = vperm.slane %v373, 4
      %v384 = vperm.slane %v376, 0
      %v385 = vperm.slane %v377, 0
      %v386 = vperm.slane %v378, 0
      %v387 = vperm.slane %v379, 0
      %v388 = vmul.f32 %v384, %v356
      %v389 = vmul.f32 %v385, %v357
      %v390 = vmul.f32 %v386, %v358
      %v391 = vmul.f32 %v387, %v359
      %v392 = vadd.f32 %v388, 0.0
      %v393 = vadd.f32 %v389, 0.0
      %v394 = vadd.f32 %v390, 0.0
      %v395 = vadd.f32 %v391, 0.0
      %v396 = vperm.slane %v372, 1
      %v397 = vperm.slane %v372, 5
      %v398 = vperm.slane %v373, 1
      %v399 = vperm.slane %v373, 5
      %v404 = vperm.slane %v396, 1
      %v405 = vperm.slane %v397, 1
      %v406 = vperm.slane %v398, 1
      %v407 = vperm.slane %v399, 1
      %v408 = vmul.f32 %v404, %v360
      %v409 = vmul.f32 %v405, %v361
      %v410 = vmul.f32 %v406, %v362
      %v411 = vmul.f32 %v407, %v363
      %v412 = vadd.f32 %v392, %v408
      %v413 = vadd.f32 %v393, %v409
      %v414 = vadd.f32 %v394, %v410
      %v415 = vadd.f32 %v395, %v411
      %v416 = vperm.slane %v372, 2
      %v417 = vperm.slane %v372, 6
      %v418 = vperm.slane %v373, 2
      %v419 = vperm.slane %v373, 6
      %v424 = vperm.slane %v416, 2
      %v425 = vperm.slane %v417, 2
      %v426 = vperm.slane %v418, 2
      %v427 = vperm.slane %v419, 2
      %v428 = vmul.f32 %v424, %v364
      %v429 = vmul.f32 %v425, %v365
      %v430 = vmul.f32 %v426, %v366
      %v431 = vmul.f32 %v427, %v367
      %v432 = vadd.f32 %v412, %v428
      %v433 = vadd.f32 %v413, %v429
      %v434 = vadd.f32 %v414, %v430
      %v435 = vadd.f32 %v415, %v431
      %v436 = vperm.slane %v372, 3
      %v437 = vperm.slane %v372, 7
      %v438 = vperm.slane %v373, 3
      %v439 = vperm.slane %v373, 7
      %v444 = vperm.slane %v436, 3
      %v445 = vperm.slane %v437, 3
      %v446 = vperm.slane %v438, 3
      %v447 = vperm.slane %v439, 3
      %v448 = vmul.f32 %v444, %v368
      %v449 = vmul.f32 %v445, %v369
      %v450 = vmul.f32 %v446, %v370
      %v451 = vmul.f32 %v447, %v371
      %v452 = vadd.f32 %v432, %v448
      %v453 = vadd.f32 %v433, %v449
      %v454 = vadd.f32 %v434, %v450
      %v455 = vadd.f32 %v435, %v451
      %v456 = vld [vmem:[%s175] sm:$0xf]
      %s457 = smul.u32 0, 256
      %v458 = vstv %s457
      %v459 = vsub.s32 %v456, %v458
      %v460 = vlaneseq
      %v461 = vshrl.u32 %v460, 7
      %v462 = vadd.s32 %v461, 8
      %v463 = vadd.s32 %v461, 16
      %v464 = vadd.s32 %v461, 24
      %v465 = vadd.s32 %v461, 32
      %v466 = vadd.s32 %v461, 40
      %v467 = vadd.s32 %v461, 48
      %v468 = vadd.s32 %v461, 56
      %v469 = vadd.s32 %v461, 64
      %v470 = vadd.s32 %v461, 72
      %v471 = vadd.s32 %v461, 80
      %v472 = vadd.s32 %v461, 88
      %v473 = vadd.s32 %v461, 96
      %v474 = vadd.s32 %v461, 104
      %v475 = vadd.s32 %v461, 112
      %v476 = vadd.s32 %v461, 120
      %v477 = vadd.s32 %v461, 128
      %v478 = vadd.s32 %v461, 136
      %v479 = vadd.s32 %v461, 144
      %v480 = vadd.s32 %v461, 152
      %v481 = vadd.s32 %v461, 160
      %v482 = vadd.s32 %v461, 168
      %v483 = vadd.s32 %v461, 176
      %v484 = vadd.s32 %v461, 184
      %v485 = vadd.s32 %v461, 192
      %v486 = vadd.s32 %v461, 200
      %v487 = vadd.s32 %v461, 208
      %v488 = vadd.s32 %v461, 216
      %v489 = vadd.s32 %v461, 224
      %v490 = vadd.s32 %v461, 232
      %v491 = vadd.s32 %v461, 240
      %v492 = vadd.s32 %v461, 248
      %v493 = vperm.slane %v459, 0
      %v494 = vperm.slane %v459, 1
      %v495 = vperm.slane %v459, 2
      %v496 = vperm.slane %v459, 3
      %vm497 = vcmp.eq.s32.totalorder %v493, %v461
      %vm498 = vcmp.eq.s32.totalorder %v494, %v461
      %vm499 = vcmp.eq.s32.totalorder %v495, %v461
      %vm500 = vcmp.eq.s32.totalorder %v496, %v461
      %vm501 = vcmp.eq.s32.totalorder %v493, %v462
      %vm502 = vcmp.eq.s32.totalorder %v494, %v462
      %vm503 = vcmp.eq.s32.totalorder %v495, %v462
      %vm504 = vcmp.eq.s32.totalorder %v496, %v462
      %vm505 = vcmp.eq.s32.totalorder %v493, %v463
      %vm506 = vcmp.eq.s32.totalorder %v494, %v463
      %vm507 = vcmp.eq.s32.totalorder %v495, %v463
      %vm508 = vcmp.eq.s32.totalorder %v496, %v463
      %vm509 = vcmp.eq.s32.totalorder %v493, %v464
      %vm510 = vcmp.eq.s32.totalorder %v494, %v464
      %vm511 = vcmp.eq.s32.totalorder %v495, %v464
      %vm512 = vcmp.eq.s32.totalorder %v496, %v464
      %vm513 = vcmp.eq.s32.totalorder %v493, %v465
      %vm514 = vcmp.eq.s32.totalorder %v494, %v465
      %vm515 = vcmp.eq.s32.totalorder %v495, %v465
      %vm516 = vcmp.eq.s32.totalorder %v496, %v465
      %vm517 = vcmp.eq.s32.totalorder %v493, %v466
      %vm518 = vcmp.eq.s32.totalorder %v494, %v466
      %vm519 = vcmp.eq.s32.totalorder %v495, %v466
      %vm520 = vcmp.eq.s32.totalorder %v496, %v466
      %vm521 = vcmp.eq.s32.totalorder %v493, %v467
      %vm522 = vcmp.eq.s32.totalorder %v494, %v467
      %vm523 = vcmp.eq.s32.totalorder %v495, %v467
      %vm524 = vcmp.eq.s32.totalorder %v496, %v467
      %vm525 = vcmp.eq.s32.totalorder %v493, %v468
      %vm526 = vcmp.eq.s32.totalorder %v494, %v468
      %vm527 = vcmp.eq.s32.totalorder %v495, %v468
      %vm528 = vcmp.eq.s32.totalorder %v496, %v468
      %vm529 = vcmp.eq.s32.totalorder %v493, %v469
      %vm530 = vcmp.eq.s32.totalorder %v494, %v469
      %vm531 = vcmp.eq.s32.totalorder %v495, %v469
      %vm532 = vcmp.eq.s32.totalorder %v496, %v469
      %vm533 = vcmp.eq.s32.totalorder %v493, %v470
      %vm534 = vcmp.eq.s32.totalorder %v494, %v470
      %vm535 = vcmp.eq.s32.totalorder %v495, %v470
      %vm536 = vcmp.eq.s32.totalorder %v496, %v470
      %vm537 = vcmp.eq.s32.totalorder %v493, %v471
      %vm538 = vcmp.eq.s32.totalorder %v494, %v471
      %vm539 = vcmp.eq.s32.totalorder %v495, %v471
      %vm540 = vcmp.eq.s32.totalorder %v496, %v471
      %vm541 = vcmp.eq.s32.totalorder %v493, %v472
      %vm542 = vcmp.eq.s32.totalorder %v494, %v472
      %vm543 = vcmp.eq.s32.totalorder %v495, %v472
      %vm544 = vcmp.eq.s32.totalorder %v496, %v472
      %vm545 = vcmp.eq.s32.totalorder %v493, %v473
      %vm546 = vcmp.eq.s32.totalorder %v494, %v473
      %vm547 = vcmp.eq.s32.totalorder %v495, %v473
      %vm548 = vcmp.eq.s32.totalorder %v496, %v473
      %vm549 = vcmp.eq.s32.totalorder %v493, %v474
      %vm550 = vcmp.eq.s32.totalorder %v494, %v474
      %vm551 = vcmp.eq.s32.totalorder %v495, %v474
      %vm552 = vcmp.eq.s32.totalorder %v496, %v474
      %vm553 = vcmp.eq.s32.totalorder %v493, %v475
      %vm554 = vcmp.eq.s32.totalorder %v494, %v475
      %vm555 = vcmp.eq.s32.totalorder %v495, %v475
      %vm556 = vcmp.eq.s32.totalorder %v496, %v475
      %vm557 = vcmp.eq.s32.totalorder %v493, %v476
      %vm558 = vcmp.eq.s32.totalorder %v494, %v476
      %vm559 = vcmp.eq.s32.totalorder %v495, %v476
      %vm560 = vcmp.eq.s32.totalorder %v496, %v476
      %vm561 = vcmp.eq.s32.totalorder %v493, %v477
      %vm562 = vcmp.eq.s32.totalorder %v494, %v477
      %vm563 = vcmp.eq.s32.totalorder %v495, %v477
      %vm564 = vcmp.eq.s32.totalorder %v496, %v477
      %vm565 = vcmp.eq.s32.totalorder %v493, %v478
      %vm566 = vcmp.eq.s32.totalorder %v494, %v478
      %vm567 = vcmp.eq.s32.totalorder %v495, %v478
      %vm568 = vcmp.eq.s32.totalorder %v496, %v478
      %vm569 = vcmp.eq.s32.totalorder %v493, %v479
      %vm570 = vcmp.eq.s32.totalorder %v494, %v479
      %vm571 = vcmp.eq.s32.totalorder %v495, %v479
      %vm572 = vcmp.eq.s32.totalorder %v496, %v479
      %vm573 = vcmp.eq.s32.totalorder %v493, %v480
      %vm574 = vcmp.eq.s32.totalorder %v494, %v480
      %vm575 = vcmp.eq.s32.totalorder %v495, %v480
      %vm576 = vcmp.eq.s32.totalorder %v496, %v480
      %vm577 = vcmp.eq.s32.totalorder %v493, %v481
      %vm578 = vcmp.eq.s32.totalorder %v494, %v481
      %vm579 = vcmp.eq.s32.totalorder %v495, %v481
      %vm580 = vcmp.eq.s32.totalorder %v496, %v481
      %vm581 = vcmp.eq.s32.totalorder %v493, %v482
      %vm582 = vcmp.eq.s32.totalorder %v494, %v482
      %vm583 = vcmp.eq.s32.totalorder %v495, %v482
      %vm584 = vcmp.eq.s32.totalorder %v496, %v482
      %vm585 = vcmp.eq.s32.totalorder %v493, %v483
      %vm586 = vcmp.eq.s32.totalorder %v494, %v483
      %vm587 = vcmp.eq.s32.totalorder %v495, %v483
      %vm588 = vcmp.eq.s32.totalorder %v496, %v483
      %vm589 = vcmp.eq.s32.totalorder %v493, %v484
      %vm590 = vcmp.eq.s32.totalorder %v494, %v484
      %vm591 = vcmp.eq.s32.totalorder %v495, %v484
      %vm592 = vcmp.eq.s32.totalorder %v496, %v484
      %vm593 = vcmp.eq.s32.totalorder %v493, %v485
      %vm594 = vcmp.eq.s32.totalorder %v494, %v485
      %vm595 = vcmp.eq.s32.totalorder %v495, %v485
      %vm596 = vcmp.eq.s32.totalorder %v496, %v485
      %vm597 = vcmp.eq.s32.totalorder %v493, %v486
      %vm598 = vcmp.eq.s32.totalorder %v494, %v486
      %vm599 = vcmp.eq.s32.totalorder %v495, %v486
      %vm600 = vcmp.eq.s32.totalorder %v496, %v486
      %vm601 = vcmp.eq.s32.totalorder %v493, %v487
      %vm602 = vcmp.eq.s32.totalorder %v494, %v487
      %vm603 = vcmp.eq.s32.totalorder %v495, %v487
      %vm604 = vcmp.eq.s32.totalorder %v496, %v487
      %vm605 = vcmp.eq.s32.totalorder %v493, %v488
      %vm606 = vcmp.eq.s32.totalorder %v494, %v488
      %vm607 = vcmp.eq.s32.totalorder %v495, %v488
      %vm608 = vcmp.eq.s32.totalorder %v496, %v488
      %vm609 = vcmp.eq.s32.totalorder %v493, %v489
      %vm610 = vcmp.eq.s32.totalorder %v494, %v489
      %vm611 = vcmp.eq.s32.totalorder %v495, %v489
      %vm612 = vcmp.eq.s32.totalorder %v496, %v489
      %vm613 = vcmp.eq.s32.totalorder %v493, %v490
      %vm614 = vcmp.eq.s32.totalorder %v494, %v490
      %vm615 = vcmp.eq.s32.totalorder %v495, %v490
      %vm616 = vcmp.eq.s32.totalorder %v496, %v490
      %vm617 = vcmp.eq.s32.totalorder %v493, %v491
      %vm618 = vcmp.eq.s32.totalorder %v494, %v491
      %vm619 = vcmp.eq.s32.totalorder %v495, %v491
      %vm620 = vcmp.eq.s32.totalorder %v496, %v491
      %vm621 = vcmp.eq.s32.totalorder %v493, %v492
      %vm622 = vcmp.eq.s32.totalorder %v494, %v492
      %vm623 = vcmp.eq.s32.totalorder %v495, %v492
      %vm624 = vcmp.eq.s32.totalorder %v496, %v492
      %v625 = vsel %vm497, 1.0, 0.0
      %v626 = vsel %vm498, 1.0, 0.0
      %v627 = vsel %vm499, 1.0, 0.0
      %v628 = vsel %vm500, 1.0, 0.0
      %v629 = vsel %vm501, 1.0, 0.0
      %v630 = vsel %vm502, 1.0, 0.0
      %v631 = vsel %vm503, 1.0, 0.0
      %v632 = vsel %vm504, 1.0, 0.0
      %v633 = vsel %vm505, 1.0, 0.0
      %v634 = vsel %vm506, 1.0, 0.0
      %v635 = vsel %vm507, 1.0, 0.0
      %v636 = vsel %vm508, 1.0, 0.0
      %v637 = vsel %vm509, 1.0, 0.0
      %v638 = vsel %vm510, 1.0, 0.0
      %v639 = vsel %vm511, 1.0, 0.0
      %v640 = vsel %vm512, 1.0, 0.0
      %v641 = vsel %vm513, 1.0, 0.0
      %v642 = vsel %vm514, 1.0, 0.0
      %v643 = vsel %vm515, 1.0, 0.0
      %v644 = vsel %vm516, 1.0, 0.0
      %v645 = vsel %vm517, 1.0, 0.0
      %v646 = vsel %vm518, 1.0, 0.0
      %v647 = vsel %vm519, 1.0, 0.0
      %v648 = vsel %vm520, 1.0, 0.0
      %v649 = vsel %vm521, 1.0, 0.0
      %v650 = vsel %vm522, 1.0, 0.0
      %v651 = vsel %vm523, 1.0, 0.0
      %v652 = vsel %vm524, 1.0, 0.0
      %v653 = vsel %vm525, 1.0, 0.0
      %v654 = vsel %vm526, 1.0, 0.0
      %v655 = vsel %vm527, 1.0, 0.0
      %v656 = vsel %vm528, 1.0, 0.0
      %v657 = vsel %vm529, 1.0, 0.0
      %v658 = vsel %vm530, 1.0, 0.0
      %v659 = vsel %vm531, 1.0, 0.0
      %v660 = vsel %vm532, 1.0, 0.0
      %v661 = vsel %vm533, 1.0, 0.0
      %v662 = vsel %vm534, 1.0, 0.0
      %v663 = vsel %vm535, 1.0, 0.0
      %v664 = vsel %vm536, 1.0, 0.0
      %v665 = vsel %vm537, 1.0, 0.0
      %v666 = vsel %vm538, 1.0, 0.0
      %v667 = vsel %vm539, 1.0, 0.0
      %v668 = vsel %vm540, 1.0, 0.0
      %v669 = vsel %vm541, 1.0, 0.0
      %v670 = vsel %vm542, 1.0, 0.0
      %v671 = vsel %vm543, 1.0, 0.0
      %v672 = vsel %vm544, 1.0, 0.0
      %v673 = vsel %vm545, 1.0, 0.0
      %v674 = vsel %vm546, 1.0, 0.0
      %v675 = vsel %vm547, 1.0, 0.0
      %v676 = vsel %vm548, 1.0, 0.0
      %v677 = vsel %vm549, 1.0, 0.0
      %v678 = vsel %vm550, 1.0, 0.0
      %v679 = vsel %vm551, 1.0, 0.0
      %v680 = vsel %vm552, 1.0, 0.0
      %v681 = vsel %vm553, 1.0, 0.0
      %v682 = vsel %vm554, 1.0, 0.0
      %v683 = vsel %vm555, 1.0, 0.0
      %v684 = vsel %vm556, 1.0, 0.0
      %v685 = vsel %vm557, 1.0, 0.0
      %v686 = vsel %vm558, 1.0, 0.0
      %v687 = vsel %vm559, 1.0, 0.0
      %v688 = vsel %vm560, 1.0, 0.0
      %v689 = vsel %vm561, 1.0, 0.0
      %v690 = vsel %vm562, 1.0, 0.0
      %v691 = vsel %vm563, 1.0, 0.0
      %v692 = vsel %vm564, 1.0, 0.0
      %v693 = vsel %vm565, 1.0, 0.0
      %v694 = vsel %vm566, 1.0, 0.0
      %v695 = vsel %vm567, 1.0, 0.0
      %v696 = vsel %vm568, 1.0, 0.0
      %v697 = vsel %vm569, 1.0, 0.0
      %v698 = vsel %vm570, 1.0, 0.0
      %v699 = vsel %vm571, 1.0, 0.0
      %v700 = vsel %vm572, 1.0, 0.0
      %v701 = vsel %vm573, 1.0, 0.0
      %v702 = vsel %vm574, 1.0, 0.0
      %v703 = vsel %vm575, 1.0, 0.0
      %v704 = vsel %vm576, 1.0, 0.0
      %v705 = vsel %vm577, 1.0, 0.0
      %v706 = vsel %vm578, 1.0, 0.0
      %v707 = vsel %vm579, 1.0, 0.0
      %v708 = vsel %vm580, 1.0, 0.0
      %v709 = vsel %vm581, 1.0, 0.0
      %v710 = vsel %vm582, 1.0, 0.0
      %v711 = vsel %vm583, 1.0, 0.0
      %v712 = vsel %vm584, 1.0, 0.0
      %v713 = vsel %vm585, 1.0, 0.0
      %v714 = vsel %vm586, 1.0, 0.0
      %v715 = vsel %vm587, 1.0, 0.0
      %v716 = vsel %vm588, 1.0, 0.0
      %v717 = vsel %vm589, 1.0, 0.0
      %v718 = vsel %vm590, 1.0, 0.0
      %v719 = vsel %vm591, 1.0, 0.0
      %v720 = vsel %vm592, 1.0, 0.0
      %v721 = vsel %vm593, 1.0, 0.0
      %v722 = vsel %vm594, 1.0, 0.0
      %v723 = vsel %vm595, 1.0, 0.0
      %v724 = vsel %vm596, 1.0, 0.0
      %v725 = vsel %vm597, 1.0, 0.0
      %v726 = vsel %vm598, 1.0, 0.0
      %v727 = vsel %vm599, 1.0, 0.0
      %v728 = vsel %vm600, 1.0, 0.0
      %v729 = vsel %vm601, 1.0, 0.0
      %v730 = vsel %vm602, 1.0, 0.0
      %v731 = vsel %vm603, 1.0, 0.0
      %v732 = vsel %vm604, 1.0, 0.0
      %v733 = vsel %vm605, 1.0, 0.0
      %v734 = vsel %vm606, 1.0, 0.0
      %v735 = vsel %vm607, 1.0, 0.0
      %v736 = vsel %vm608, 1.0, 0.0
      %v737 = vsel %vm609, 1.0, 0.0
      %v738 = vsel %vm610, 1.0, 0.0
      %v739 = vsel %vm611, 1.0, 0.0
      %v740 = vsel %vm612, 1.0, 0.0
      %v741 = vsel %vm613, 1.0, 0.0
      %v742 = vsel %vm614, 1.0, 0.0
      %v743 = vsel %vm615, 1.0, 0.0
      %v744 = vsel %vm616, 1.0, 0.0
      %v745 = vsel %vm617, 1.0, 0.0
      %v746 = vsel %vm618, 1.0, 0.0
      %v747 = vsel %vm619, 1.0, 0.0
      %v748 = vsel %vm620, 1.0, 0.0
      %v749 = vsel %vm621, 1.0, 0.0
      %v750 = vsel %vm622, 1.0, 0.0
      %v751 = vsel %vm623, 1.0, 0.0
      %v752 = vsel %vm624, 1.0, 0.0
      %v753 = vld [vmem:[#allocation2] sm:$0xff]
      %v754 = vld [vmem:[#allocation2 + $0x8] sm:$0xff]
      %755 = vmatpush.xpose.msra.mxu0 %v685
      %756 = vmatpush.xpose.msra.mxu0 %v681
      %757 = vmatpush.xpose.msra.mxu0 %v677
      %758 = vmatpush.xpose.msra.mxu0 %v673
      %759 = vmatpush.xpose.msra.mxu0 %v669
      %760 = vmatpush.xpose.msra.mxu0 %v665
      %761 = vmatpush.xpose.msra.mxu0 %v661
      %762 = vmatpush.xpose.msra.mxu0 %v657
      %763 = vmatpush.xpose.msra.mxu0 %v653
      %764 = vmatpush.xpose.msra.mxu0 %v649
      %765 = vmatpush.xpose.msra.mxu0 %v645
      %766 = vmatpush.xpose.msra.mxu0 %v641
      %767 = vmatpush.xpose.msra.mxu0 %v637
      %768 = vmatpush.xpose.msra.mxu0 %v633
      %769 = vmatpush.xpose.msra.mxu0 %v629
      %770 = vmatpush.xpose.msra.mxu0 %v625
      %771 = vmatmul.f32.gmra.mxu0 %v452
      %v772 = vpop.f32.mrf.mxu0
      %v773 = vadd.f32 0.0, %v772
      %774 = vdwg.mxu0
      %775 = vmatpush.xpose.msra.mxu0 %v686
      %776 = vmatpush.xpose.msra.mxu0 %v682
      %777 = vmatpush.xpose.msra.mxu0 %v678
      %778 = vmatpush.xpose.msra.mxu0 %v674
      %779 = vmatpush.xpose.msra.mxu0 %v670
      %780 = vmatpush.xpose.msra.mxu0 %v666
      %781 = vmatpush.xpose.msra.mxu0 %v662
      %782 = vmatpush.xpose.msra.mxu0 %v658
      %783 = vmatpush.xpose.msra.mxu0 %v654
      %784 = vmatpush.xpose.msra.mxu0 %v650
      %785 = vmatpush.xpose.msra.mxu0 %v646
      %786 = vmatpush.xpose.msra.mxu0 %v642
      %787 = vmatpush.xpose.msra.mxu0 %v638
      %788 = vmatpush.xpose.msra.mxu0 %v634
      %789 = vmatpush.xpose.msra.mxu0 %v630
      %790 = vmatpush.xpose.msra.mxu0 %v626
      %791 = vmatmul.f32.gmra.mxu0 %v453
      %v792 = vpop.f32.mrf.mxu0
      %v793 = vadd.f32 %v773, %v792
      %794 = vdwg.mxu0
      %795 = vmatpush.xpose.msra.mxu0 %v687
      %796 = vmatpush.xpose.msra.mxu0 %v683
      %797 = vmatpush.xpose.msra.mxu0 %v679
      %798 = vmatpush.xpose.msra.mxu0 %v675
      %799 = vmatpush.xpose.msra.mxu0 %v671
      %800 = vmatpush.xpose.msra.mxu0 %v667
      %801 = vmatpush.xpose.msra.mxu0 %v663
      %802 = vmatpush.xpose.msra.mxu0 %v659
      %803 = vmatpush.xpose.msra.mxu0 %v655
      %804 = vmatpush.xpose.msra.mxu0 %v651
      %805 = vmatpush.xpose.msra.mxu0 %v647
      %806 = vmatpush.xpose.msra.mxu0 %v643
      %807 = vmatpush.xpose.msra.mxu0 %v639
      %808 = vmatpush.xpose.msra.mxu0 %v635
      %809 = vmatpush.xpose.msra.mxu0 %v631
      %810 = vmatpush.xpose.msra.mxu0 %v627
      %811 = vmatmul.f32.gmra.mxu0 %v454
      %v812 = vpop.f32.mrf.mxu0
      %v813 = vadd.f32 %v793, %v812
      %814 = vdwg.mxu0
      %815 = vmatpush.xpose.msra.mxu0 %v688
      %816 = vmatpush.xpose.msra.mxu0 %v684
      %817 = vmatpush.xpose.msra.mxu0 %v680
      %818 = vmatpush.xpose.msra.mxu0 %v676
      %819 = vmatpush.xpose.msra.mxu0 %v672
      %820 = vmatpush.xpose.msra.mxu0 %v668
      %821 = vmatpush.xpose.msra.mxu0 %v664
      %822 = vmatpush.xpose.msra.mxu0 %v660
      %823 = vmatpush.xpose.msra.mxu0 %v656
      %824 = vmatpush.xpose.msra.mxu0 %v652
      %825 = vmatpush.xpose.msra.mxu0 %v648
      %826 = vmatpush.xpose.msra.mxu0 %v644
      %827 = vmatpush.xpose.msra.mxu0 %v640
      %828 = vmatpush.xpose.msra.mxu0 %v636
      %829 = vmatpush.xpose.msra.mxu0 %v632
      %830 = vmatpush.xpose.msra.mxu0 %v628
      %831 = vmatmul.f32.gmra.mxu0 %v455
      %v832 = vpop.f32.mrf.mxu0
      %v833 = vadd.f32 %v813, %v832
      %834 = vdwg.mxu0
      %835 = vmatpush.xpose.msra.mxu0 %v749
      %836 = vmatpush.xpose.msra.mxu0 %v745
      %837 = vmatpush.xpose.msra.mxu0 %v741
      %838 = vmatpush.xpose.msra.mxu0 %v737
      %839 = vmatpush.xpose.msra.mxu0 %v733
      %840 = vmatpush.xpose.msra.mxu0 %v729
      %841 = vmatpush.xpose.msra.mxu0 %v725
      %842 = vmatpush.xpose.msra.mxu0 %v721
      %843 = vmatpush.xpose.msra.mxu0 %v717
      %844 = vmatpush.xpose.msra.mxu0 %v713
      %845 = vmatpush.xpose.msra.mxu0 %v709
      %846 = vmatpush.xpose.msra.mxu0 %v705
      %847 = vmatpush.xpose.msra.mxu0 %v701
      %848 = vmatpush.xpose.msra.mxu0 %v697
      %849 = vmatpush.xpose.msra.mxu0 %v693
      %850 = vmatpush.xpose.msra.mxu0 %v689
      %851 = vmatmul.f32.gmra.mxu0 %v452
      %v852 = vpop.f32.mrf.mxu0
      %v853 = vadd.f32 0.0, %v852
      %854 = vdwg.mxu0
      %855 = vmatpush.xpose.msra.mxu0 %v750
      %856 = vmatpush.xpose.msra.mxu0 %v746
      %857 = vmatpush.xpose.msra.mxu0 %v742
      %858 = vmatpush.xpose.msra.mxu0 %v738
      %859 = vmatpush.xpose.msra.mxu0 %v734
      %860 = vmatpush.xpose.msra.mxu0 %v730
      %861 = vmatpush.xpose.msra.mxu0 %v726
      %862 = vmatpush.xpose.msra.mxu0 %v722
      %863 = vmatpush.xpose.msra.mxu0 %v718
      %864 = vmatpush.xpose.msra.mxu0 %v714
      %865 = vmatpush.xpose.msra.mxu0 %v710
      %866 = vmatpush.xpose.msra.mxu0 %v706
      %867 = vmatpush.xpose.msra.mxu0 %v702
      %868 = vmatpush.xpose.msra.mxu0 %v698
      %869 = vmatpush.xpose.msra.mxu0 %v694
      %870 = vmatpush.xpose.msra.mxu0 %v690
      %871 = vmatmul.f32.gmra.mxu0 %v453
      %v872 = vpop.f32.mrf.mxu0
      %v873 = vadd.f32 %v853, %v872
      %874 = vdwg.mxu0
      %875 = vmatpush.xpose.msra.mxu0 %v751
      %876 = vmatpush.xpose.msra.mxu0 %v747
      %877 = vmatpush.xpose.msra.mxu0 %v743
      %878 = vmatpush.xpose.msra.mxu0 %v739
      %879 = vmatpush.xpose.msra.mxu0 %v735
      %880 = vmatpush.xpose.msra.mxu0 %v731
      %881 = vmatpush.xpose.msra.mxu0 %v727
      %882 = vmatpush.xpose.msra.mxu0 %v723
      %883 = vmatpush.xpose.msra.mxu0 %v719
      %884 = vmatpush.xpose.msra.mxu0 %v715
      %885 = vmatpush.xpose.msra.mxu0 %v711
      %886 = vmatpush.xpose.msra.mxu0 %v707
      %887 = vmatpush.xpose.msra.mxu0 %v703
      %888 = vmatpush.xpose.msra.mxu0 %v699
      %889 = vmatpush.xpose.msra.mxu0 %v695
      %890 = vmatpush.xpose.msra.mxu0 %v691
      %891 = vmatmul.f32.gmra.mxu0 %v454
      %v892 = vpop.f32.mrf.mxu0
      %v893 = vadd.f32 %v873, %v892
      %894 = vdwg.mxu0
      %895 = vmatpush.xpose.msra.mxu0 %v752
      %896 = vmatpush.xpose.msra.mxu0 %v748
      %897 = vmatpush.xpose.msra.mxu0 %v744
      %898 = vmatpush.xpose.msra.mxu0 %v740
      %899 = vmatpush.xpose.msra.mxu0 %v736
      %900 = vmatpush.xpose.msra.mxu0 %v732
      %901 = vmatpush.xpose.msra.mxu0 %v728
      %902 = vmatpush.xpose.msra.mxu0 %v724
      %903 = vmatpush.xpose.msra.mxu0 %v720
      %904 = vmatpush.xpose.msra.mxu0 %v716
      %905 = vmatpush.xpose.msra.mxu0 %v712
      %906 = vmatpush.xpose.msra.mxu0 %v708
      %907 = vmatpush.xpose.msra.mxu0 %v704
      %908 = vmatpush.xpose.msra.mxu0 %v700
      %909 = vmatpush.xpose.msra.mxu0 %v696
      %910 = vmatpush.xpose.msra.mxu0 %v692
      %911 = vmatmul.f32.gmra.mxu0 %v455
      %v912 = vpop.f32.mrf.mxu0
      %v913 = vadd.f32 %v893, %v912
      %914 = vdwg.mxu0
      %v915 = vadd.f32 %v753, %v833
      %v916 = vadd.f32 %v754, %v913
      %917 = vst [vmem:[#allocation2] sm:$0xff] %v915
      %918 = vst [vmem:[#allocation2 + $0x8] sm:$0xff] %v916
    $region37: #{tpu_custom_call.1} parent=1 // pred_fallthru
      _
    // Predicated region
    $region38: #{tpu_custom_call.1} parent=1 // pred_check
      %p919 = pneg %p184
    $region39: #{tpu_custom_call.1} parent=1 // pred_check_branch
      %921 = sbr.rel (%p919) target = $region41
    $region40: #{tpu_custom_call.1} parent=1 // pred_region
      %v922 = vld [vmem:[#allocation2] sm:$0xff]
      %v923 = vld [vmem:[#allocation2 + $0x8] sm:$0xff]
      %v924 = vld [vmem:[%s5] sm:$0x3]
      %v926 = vperm.slane %v924, 0
      %v927 = vperm.slane %v924, 1
      %v930 = vmul.f32 %v922, %v926
      %v931 = vmul.f32 %v923, %v927
      %v932 = vld [vmem:[%s8] sm:$0xff]
      %934 = vset.pattern.permute.xlu0 0
      %935 = vperm.xlu0 %934, %v932
      %v936 = vpop.permute.xlu0 %935
      %v938 = vadd.f32 %v930, %v936
      %v939 = vadd.f32 %v931, %v936
      %vm940 = vcmp.gt.f32.partialorder %v938, 0.0
      %vm941 = vcmp.gt.f32.partialorder %v939, 0.0
      %v942 = vmin.f32 %v938, 0.0
      %v943 = vmin.f32 %v939, 0.0
      %v944 = vmul.f32 %v942, 1.442695
      %v945 = vpow.pop %v944
      %v946 = vmul.f32 %v943, 1.442695
      %v947 = vpow.pop %v946
      %v948 = vsub.f32 %v945, 1.0
      %v949 = vsub.f32 %v947, 1.0
      %v950 = vsel %vm940, %v938, %v948
      %v951 = vsel %vm941, %v939, %v949
      %952 = vst [vmem:[#allocation6] sm:$0xff] %v950
      %953 = vst [vmem:[#allocation6 + $0x8] sm:$0xff] %v951
    $region41: #{tpu_custom_call.1} parent=1 // pred_fallthru
      _
    // Predicated region
    $region42: #{tpu_custom_call.1} parent=1 // pred_check
      _
    $region43: #{tpu_custom_call.1} parent=1 // pred_check_branch
      %955 = sbr.rel (0) target = $region45
    $region44: #{tpu_custom_call.1} parent=1 // pred_region
      %957 = vsyncadd [#allocation7], 0
      %s959 = sshll.u32 [#allocation6], 4
      %s960 = int_to_ptr.vmem [resolvable:$true] %s959
      %s961 = sshll.u32 %s9, 4
      %s962 = int_to_ptr.hbm [resolvable:$true] %s961
      %964 = dma.vmem_to_hbm [thread:$0]  %s960, 256, %s962, [#allocation7]
    $region45: #{tpu_custom_call.1} parent=1 // pred_fallthru
      _
    // Predicated region
    $region46: #{tpu_custom_call.1} parent=1 // pred_check
      _
    $region47: #{tpu_custom_call.1} parent=1 // pred_check_branch
      %966 = sbr.rel (0) target = $region49
    $region48: #{tpu_custom_call.1} parent=1 // pred_region
      %968 = dma.done [#allocation7], 256
    $region49: #{tpu_custom_call.1} parent=1 // pred_fallthru
      _
    %969 = vsyncpa [#allocation7], 1

</llo_original>
